<compile_context>
chip_gen: v6e
topology: v6e:2x2x1
jax: 0.10.0
libtpu: 0.0.40
codegen_flags: <defaults>
</compile_context>

<pallas_src>
import functools

import jax
import jax.numpy as jnp
from jax.experimental import pallas as pl
from jax.experimental.pallas import tpu as pltpu


def _head_kernel(x_ref, w1_ref, b1_ref, w2_ref, b2_ref, o_ref, acc_ref):
    # Grid axis 0 iterates over column tiles of W1 (== row tiles of W2):
    # a reduction axis, so the output block / accumulator is resident.
    j = pl.program_id(0)

    @pl.when(j == 0)
    def _():
        acc_ref[...] = jnp.zeros_like(acc_ref)

    # h_tile = tanh(x @ W1[:, tile] + b1[tile])      (B, tile_n), f32
    h = jnp.dot(x_ref[...], w1_ref[...], preferred_element_type=jnp.float32)
    h = jnp.tanh(h + b1_ref[...])

    # acc += h_tile @ W2[tile, :]                    (B, Lp), f32
    acc_ref[...] += jnp.dot(
        h.astype(jnp.bfloat16), w2_ref[...], preferred_element_type=jnp.float32
    )

    @pl.when(j == pl.num_programs(0) - 1)
    def _():
        o_ref[...] = (acc_ref[...] + b2_ref[...]).astype(o_ref.dtype)


def prepare_head_params(w1, b1, w2, b2):
    """One-time weight preprocessing. Call once and cache the result.

    w1: (2H, 2H); b1: (2H,); w2: (2H, L); b2: (L,)  (all in_features-major).
    Returns bf16 weights, a lane-padded W2/b2 and f32 row-shaped biases.
    """
    twoH = w1.shape[0]
    L = w2.shape[1]
    Lp = 128 * pl.cdiv(L, 128)  # lane-dense (padded) label dimension

    w1_bf = w1.astype(jnp.bfloat16)
    w2_pad = jnp.zeros((twoH, Lp), dtype=jnp.bfloat16).at[:, :L].set(
        w2.astype(jnp.bfloat16)
    )
    b1_row = b1.reshape(1, twoH).astype(jnp.float32)
    b2_pad = jnp.zeros((1, Lp), dtype=jnp.float32).at[0, :L].set(
        b2.astype(jnp.float32)
    )
    return {"w1": w1_bf, "b1": b1_row, "w2": w2_pad, "b2": b2_pad,
            "num_labels": L}


def _pick_tile_n(twoH, max_w1_buf_bytes=24 << 20):
    """Largest lane-aligned W1 column tile giving 2-4 grid steps.

    Capped so the double-buffered bf16 W1 tile (2 * 2H * tile_n * 2B) stays
    comfortably inside VMEM on v5e/v6e/v7x.
    """
    if twoH % 128 != 0:
        return twoH  # non-lane-aligned fallback: single full block (legal).
    cap = max(128, max_w1_buf_bytes // (2 * twoH * 2))
    for n_tiles in (2, 3, 4):
        t = twoH // n_tiles
        if t % 128 == 0 and twoH % t == 0 and t <= cap:
            return t
    # Fall back to the largest 128-multiple divisor under the cap.
    for t in range(twoH, 0, -128):
        if twoH % t == 0 and t <= cap:
            return t
    return 128


def roberta_classification_head_two_contact(features, params, *, tile_n=None):
    """Eval-mode forward of RobertaClassificationHead_twoContact.

    features: (B, 2H) activations; params: output of prepare_head_params
    (weights already cast / padded once, so there is no per-call weight
    conversion traffic).
    """
    w1_bf = params["w1"]
    b1_row = params["b1"]
    w2_pad = params["w2"]
    b2_pad = params["b2"]
    L = params["num_labels"]

    B, twoH = features.shape
    Lp = w2_pad.shape[1]
    out_dtype = features.dtype
    out_itemsize = jnp.dtype(out_dtype).itemsize

    if tile_n is None:
        tile_n = _pick_tile_n(twoH)
    assert twoH % tile_n == 0, "2*hidden_size must be divisible by tile_n"
    n_tiles = twoH // tile_n

    # Only the (small) activation cast remains per-call.
    x_bf = features.astype(jnp.bfloat16)

    # VMEM budget (double-buffered inputs + resident output + f32 scratch),
    # with 2x headroom, clamped to [32 MiB, 64 MiB] so it is legal on every
    # chip and never below the v6e default.
    vmem_need = (
        2 * B * twoH * 2            # x (resident; budgeted as double-buffered)
        + 2 * twoH * tile_n * 2     # W1 tile, bf16, double-buffered
        + 2 * tile_n * Lp * 2       # W2 tile, bf16, double-buffered
        + 2 * twoH * 4 + 2 * Lp * 4 # biases (f32)
        + B * Lp * 4                # f32 accumulator scratch
        + 2 * B * Lp * out_itemsize # output
    )
    vmem_limit = int(min(64 << 20, max(32 << 20, 2 * vmem_need)))

    cost = pl.CostEstimate(
        flops=2 * B * twoH * (twoH + Lp),
        transcendentals=B * twoH,  # tanh
        bytes_accessed=(B * twoH * 2 + twoH * twoH * 2 + twoH * 4
                        + twoH * Lp * 2 + Lp * 4 + B * Lp * out_itemsize),
    )

    out_padded = pl.pallas_call(
        _head_kernel,
        out_shape=jax.ShapeDtypeStruct((B, Lp), out_dtype),
        grid_spec=pltpu.PrefetchScalarGridSpec(
            num_scalar_prefetch=0,
            grid=(n_tiles,),
            in_specs=[
                pl.BlockSpec((B, twoH), lambda j: (0, 0)),       # x (resident)
                pl.BlockSpec((twoH, tile_n), lambda j: (0, j)),  # W1 col tile
                pl.BlockSpec((1, tile_n), lambda j: (0, j)),     # b1 tile
                pl.BlockSpec((tile_n, Lp), lambda j: (j, 0)),    # W2 row tile
                pl.BlockSpec((1, Lp), lambda j: (0, 0)),         # b2 (resident)
            ],
            out_specs=pl.BlockSpec((B, Lp), lambda j: (0, 0)),   # accumulator
            scratch_shapes=[pltpu.VMEM((B, Lp), jnp.float32)],
        ),
        compiler_params=pltpu.CompilerParams(
            dimension_semantics=("arbitrary",),  # reduction over column tiles
            vmem_limit_bytes=vmem_limit,
        ),
        cost_estimate=cost,
    )(x_bf, w1_bf, b1_row, w2_pad, b2_pad)

    return out_padded[:, :L]


def _reference(features, w1, b1, w2, b2):
    h = jnp.tanh(features @ w1 + b1)
    return h @ w2 + b2


if __name__ == "__main__":
    # Small config: hidden_size=128 -> 2*hidden=256, num_labels=8, batch=8.
    # Auto tile_n=128 -> grid=(2,), exercising the multi-step accumulation.
    B = 8
    hidden = 128
    twoH = 2 * hidden
    num_labels = 8

    key = jax.random.PRNGKey(0)
    k_x, k_w1, k_b1, k_w2, k_b2 = jax.random.split(key, 5)

    # Deterministic, nn.Linear-like uniform init (bound = 1/sqrt(fan_in)).
    bound1 = 1.0 / (twoH ** 0.5)
    features = jax.random.normal(k_x, (B, twoH), dtype=jnp.float32)
    w1 = jax.random.uniform(k_w1, (twoH, twoH), jnp.float32, -bound1, bound1)
    b1 = jax.random.uniform(k_b1, (twoH,), jnp.float32, -bound1, bound1)
    w2 = jax.random.uniform(k_w2, (twoH, num_labels), jnp.float32, -bound1, bound1)
    b2 = jax.random.uniform(k_b2, (num_labels,), jnp.float32, -bound1, bound1)

    # One-time weight preprocessing (cast/pad) — hoisted out of the hot path.
    params = prepare_head_params(w1, b1, w2, b2)
    params = jax.tree_util.tree_map(
        lambda a: jax.block_until_ready(a) if isinstance(a, jax.Array) else a,
        params,
    )

    out = roberta_classification_head_two_contact(features, params)
    out = jax.block_until_ready(out)

    ref = _reference(features, w1, b1, w2, b2)
    assert out.shape == (B, num_labels)
    # bf16 MXU operands -> loosen tolerance vs the pure-f32 reference.
    assert jnp.allclose(out, ref, atol=3e-2, rtol=3e-2), float(
        jnp.max(jnp.abs(out - ref))
    )

    print("KERNEL_OK")
</pallas_src>

<mosaic_0001>
module attributes {stable_mosaic.version = 11 : i64} {
  func.func @_head_kernel(%arg0: i32, %arg1: memref<8x256xbf16, #tpu.memory_space<vmem>>, %arg2: memref<256x128xbf16, #tpu.memory_space<vmem>>, %arg3: memref<1x128xf32, #tpu.memory_space<vmem>>, %arg4: memref<128x128xbf16, #tpu.memory_space<vmem>>, %arg5: memref<1x128xf32, #tpu.memory_space<vmem>>, %arg6: memref<8x128xf32, #tpu.memory_space<vmem>>, %arg7: memref<8x128xf32, #tpu.memory_space<vmem>>) attributes {dimension_semantics = [#tpu.dimension_semantics<arbitrary>], iteration_bounds = array<i64: 2>, scalar_prefetch = 0 : i64, scratch_operands = 1 : i64, tpu.core_type = #tpu.core_type<tc>, window_params = [{pipeline_mode = #tpu.pipeline_mode<synchronous>, transform_indices = @transform_0, window_bounds = array<i64: 8, 256>}, {transform_indices = @transform_1, window_bounds = array<i64: 256, 128>}, {transform_indices = @transform_2, window_bounds = array<i64: 1, 128>}, {transform_indices = @transform_3, window_bounds = array<i64: 128, 128>}, {pipeline_mode = #tpu.pipeline_mode<synchronous>, transform_indices = @transform_4, window_bounds = array<i64: 1, 128>}, {pipeline_mode = #tpu.pipeline_mode<synchronous>, transform_indices = @transform_5, window_bounds = array<i64: 8, 128>}]} {
    %c0_i32 = arith.constant 0 : i32
    %0 = arith.cmpi eq, %arg0, %c0_i32 : i32
    %1 = arith.extui %0 : i1 to i32
    %c0_i32_0 = arith.constant 0 : i32
    %2 = arith.cmpi ne, %1, %c0_i32_0 : i32
    scf.if %2 {
      %cst_14 = arith.constant 0.000000e+00 : f32
      %19 = vector.broadcast %cst_14 : f32 to vector<8x128xf32>
      %c0_15 = arith.constant 0 : index
      %c0_16 = arith.constant 0 : index
      %20 = vector.load %arg7[%c0_15, %c0_16] : memref<8x128xf32, #tpu.memory_space<vmem>>, vector<8x128xf32>
      tpu.vector_store %arg7[%c0_15, %c0_16], %19 {strides = array<i32>} : memref<8x128xf32, #tpu.memory_space<vmem>>, vector<8x128xf32>,
    } else {
    }
    %c0 = arith.constant 0 : index
    %c0_1 = arith.constant 0 : index
    %3 = vector.load %arg1[%c0, %c0_1] : memref<8x256xbf16, #tpu.memory_space<vmem>>, vector<8x256xbf16>
    %c0_2 = arith.constant 0 : index
    %c0_3 = arith.constant 0 : index
    %4 = vector.load %arg2[%c0_2, %c0_3] : memref<256x128xbf16, #tpu.memory_space<vmem>>, vector<256x128xbf16>
    %cst = arith.constant dense<0.000000e+00> : vector<8x128xf32>
    %5 = tpu.matmul %3, %4, %cst {dimension_numbers = #tpu.dot_dimension_numbers<[1], [0], [0], [1], [0, 0, 1, 1], [], []>} : vector<8x256xbf16>, vector<256x128xbf16>, vector<8x128xf32> -> vector<8x128xf32>
    %c0_4 = arith.constant 0 : index
    %c0_5 = arith.constant 0 : index
    %6 = vector.load %arg3[%c0_4, %c0_5] : memref<1x128xf32, #tpu.memory_space<vmem>>, vector<1x128xf32>
    %7 = vector.broadcast %6 : vector<1x128xf32> to vector<8x128xf32>
    %8 = arith.addf %5, %7 : vector<8x128xf32>
    %9 = math.tanh %8 : vector<8x128xf32>
    %c0_6 = arith.constant 0 : index
    %c0_7 = arith.constant 0 : index
    %10 = vector.load %arg7[%c0_6, %c0_7] : memref<8x128xf32, #tpu.memory_space<vmem>>, vector<8x128xf32>
    %11 = arith.truncf %9 : vector<8x128xf32> to vector<8x128xbf16>
    %c0_8 = arith.constant 0 : index
    %c0_9 = arith.constant 0 : index
    %12 = vector.load %arg4[%c0_8, %c0_9] : memref<128x128xbf16, #tpu.memory_space<vmem>>, vector<128x128xbf16>
    %cst_10 = arith.constant dense<0.000000e+00> : vector<8x128xf32>
    %13 = tpu.matmul %11, %12, %cst_10 {dimension_numbers = #tpu.dot_dimension_numbers<[1], [0], [0], [1], [0, 0, 1, 1], [], []>} : vector<8x128xbf16>, vector<128x128xbf16>, vector<8x128xf32> -> vector<8x128xf32>
    %14 = arith.addf %10, %13 : vector<8x128xf32>
    %c0_11 = arith.constant 0 : index
    %c0_12 = arith.constant 0 : index
    %15 = vector.load %arg7[%c0_11, %c0_12] : memref<8x128xf32, #tpu.memory_space<vmem>>, vector<8x128xf32>
    tpu.vector_store %arg7[%c0_11, %c0_12], %14 {strides = array<i32>} : memref<8x128xf32, #tpu.memory_space<vmem>>, vector<8x128xf32>,
    %c1_i32 = arith.constant 1 : i32
    %16 = arith.cmpi eq, %arg0, %c1_i32 : i32
    %17 = arith.extui %16 : i1 to i32
    %c0_i32_13 = arith.constant 0 : i32
    %18 = arith.cmpi ne, %17, %c0_i32_13 : i32
    scf.if %18 {
      %c0_14 = arith.constant 0 : index
      %c0_15 = arith.constant 0 : index
      %19 = vector.load %arg7[%c0_14, %c0_15] : memref<8x128xf32, #tpu.memory_space<vmem>>, vector<8x128xf32>
      %c0_16 = arith.constant 0 : index
      %c0_17 = arith.constant 0 : index
      %20 = vector.load %arg5[%c0_16, %c0_17] : memref<1x128xf32, #tpu.memory_space<vmem>>, vector<1x128xf32>
      %21 = vector.broadcast %20 : vector<1x128xf32> to vector<8x128xf32>
      %22 = arith.addf %19, %21 : vector<8x128xf32>
      %c0_18 = arith.constant 0 : index
      %c0_19 = arith.constant 0 : index
      %23 = vector.load %arg6[%c0_18, %c0_19] : memref<8x128xf32, #tpu.memory_space<vmem>>, vector<8x128xf32>
      tpu.vector_store %arg6[%c0_18, %c0_19], %22 {strides = array<i32>} : memref<8x128xf32, #tpu.memory_space<vmem>>, vector<8x128xf32>,
    } else {
    }
    return
  }
  func.func @transform_0(%arg0: i32) -> (i32, i32) {
    %c0_i32 = arith.constant 0 : i32
    %c0_i32_0 = arith.constant 0 : i32
    %c0_i32_1 = arith.constant 0 : i32
    return %c0_i32, %c0_i32_0 : i32, i32
  }
  func.func @transform_1(%arg0: i32) -> (i32, i32) {
    %c0_i32 = arith.constant 0 : i32
    %c0_i32_0 = arith.constant 0 : i32
    return %c0_i32, %arg0 : i32, i32
  }
  func.func @transform_2(%arg0: i32) -> (i32, i32) {
    %c0_i32 = arith.constant 0 : i32
    %c0_i32_0 = arith.constant 0 : i32
    return %c0_i32, %arg0 : i32, i32
  }
  func.func @transform_3(%arg0: i32) -> (i32, i32) {
    %c0_i32 = arith.constant 0 : i32
    %c0_i32_0 = arith.constant 0 : i32
    return %arg0, %c0_i32 : i32, i32
  }
  func.func @transform_4(%arg0: i32) -> (i32, i32) {
    %c0_i32 = arith.constant 0 : i32
    %c0_i32_0 = arith.constant 0 : i32
    %c0_i32_1 = arith.constant 0 : i32
    return %c0_i32, %c0_i32_0 : i32, i32
  }
  func.func @transform_5(%arg0: i32) -> (i32, i32) {
    %c0_i32 = arith.constant 0 : i32
    %c0_i32_0 = arith.constant 0 : i32
    %c0_i32_1 = arith.constant 0 : i32
    return %c0_i32, %c0_i32_0 : i32, i32
  }
}

</mosaic_0001>

<llo_original>
// kernel: tpu_custom_call.1
$region0: #{tpu_custom_call.1}
  #allocation0 [shape = 'u32[]', space=smem, size = 0x4, offset = 0x4, fixed_abs, tag = 'smem constant byte address 0x4 - core index']
  #allocation1 [shape = 'u32[144,128]{1,0:T(1,128)}', space=vmem, size = 0x12000, scoped, tag = 'internal scratch']
  #allocation2 [shape = 'f32[8,128]{1,0:T(8,128)}', space=vmem, size = 0x1000, scoped, tag = 'scratch operand']
  %s0 = inlined_call_operand.hbm [shape: bf16[8,256], index: 0, kind: input, shape index: {}]
  %s1 = inlined_call_operand.hbm [shape: bf16[256,256], index: 1, kind: input, shape index: {}]
  %s2 = inlined_call_operand.vmem [shape: f32[1,256], index: 2, kind: input, shape index: {}]
  %s3 = inlined_call_operand.hbm [shape: bf16[256,128], index: 3, kind: input, shape index: {}]
  %s4 = inlined_call_operand.vmem [shape: f32[1,128], index: 4, kind: input, shape index: {}]
  %s5 = inlined_call_operand.hbm [shape: f32[8,128], index: 5, kind: output, shape index: {}]
  %s6 = sld [smem:[#allocation0]]
  $region73: #{tpu_custom_call.1} parent=0
    _
  %s8 = ssub.s32 1, %s6
  %s9 = scalar_select 0, %s8, %s6
  $region1: #{tpu_custom_call.1} parent=0
    #allocation3 [shape = 'u8[4096]{0}', space=vmem, size = 0x1000, scoped, tag = 'input window, operand 0, single buffered']
    #allocation4 [shape = 's32[2]{0}', space=sflag, size = 0x8, scoped, tag = 'scoped memory for tpu_custom_call.1']
    #allocation5 [shape = 's32[2]{0}', space=sflag, size = 0x8, scoped, tag = 'scoped memory for tpu_custom_call.1']
    #allocation6 [shape = 'u8[131072]{0}', space=vmem, size = 0x20000, scoped, tag = 'input window, operand 1']
    #allocation7 [shape = 's32[2]{0}', space=sflag, size = 0x8, scoped, tag = 'scoped memory for tpu_custom_call.1']
    #allocation8 [shape = 'u8[65536]{0}', space=vmem, size = 0x10000, scoped, tag = 'input window, operand 3']
    #allocation9 [shape = 'u8[4096]{0}', space=vmem, size = 0x1000, scoped, tag = 'output window, operand 0, single buffered']
    %10 = vsyncpa [#allocation4], 0
    %11 = vsyncpa [#allocation7], 0
    %s12 = scalar_lea.sflag [#allocation7], 1
    %13 = vsyncpa %s12, 0
    %14 = vsyncpa [#allocation5], 0
    loop: start=0, step=1, limit=4
    $region2: #{tpu_custom_call.1} parent=1 // loop_pre_header
      _
    $region3: #{tpu_custom_call.1} parent=1 // loop_header
      %s16 = sphi 0, %s20
      %p17 = scmp.ge.s32.totalorder %s16, 4
      %s24 = sphi 0, %s24
      %s26 = sphi 0, %s24
      %s27 = sphi 0, %s26
      %s41 = sphi 0, %s27
      %s47 = sphi 0, %s49
      %s50 = sphi 0, %s47
      %s51 = sphi 0, %s50
      %s67 = sphi 0, %s51
      %s73 = sphi 0, %s75
      %s76 = sphi 0, %s73
      %s77 = sphi 0, %s76
      %s93 = sphi 0, %s77
      %s99 = sphi 0, %s101
      %s102 = sphi 0, %s99
      %s103 = sphi 0, %s102
      %s119 = sphi 0, %s103
      %s123 = sphi 0, %s123
      %s125 = sphi 0, %s123
      %s126 = sphi 0, %s125
      %s140 = sphi 0, %s126
      %s144 = sphi 0, %s144
      %s146 = sphi 0, %s144
      %s147 = sphi 0, %s146
      %s161 = sphi 0, %s147
    $region4: #{tpu_custom_call.1} parent=1 // loop_header_branch
      %19 = sbr.rel (%p17) target = $region8
    $region5: #{tpu_custom_call.1} parent=1 // loop_body
      %s21 = ssub.s32 %s16, 1
      %s22 = ssub.s32 %s16, 2
      %s23 = sadd.s32 %s16, 1
      %s25 = sadd.s32 %s24, 1
      %p28 = scmp.eq.s32.totalorder %s16, 1
      %p29 = scmp.ne.s32.totalorder %s24, %s26
      %p30 = scmp.eq.s32.totalorder %s16, 0
      %p31 = por %p29, %p30
      %p32 = scmp.ne.s32.totalorder %s24, %s26
      %p33 = scmp.eq.s32.totalorder %s21, 1
      %p34 = por %p32, %p33
      %p35 = scmp.ne.s32.totalorder %s26, %s27
      %p36 = scmp.eq.s32.totalorder %s21, 0
      %p37 = por %p35, %p36
      %p38 = scmp.ne.s32.totalorder %s26, %s27
      %p39 = scmp.eq.s32.totalorder %s22, 1
      %p40 = por %p38, %p39
      %p42 = scmp.ne.s32.totalorder %s27, %s41
      %p43 = scmp.eq.s32.totalorder %s22, 0
      %p44 = por %p42, %p43
      %s45 = ssub.s32 %s16, %s23
      %p46 = scmp.eq.s32.totalorder %s45, 0
      %s48 = sadd.s32 %s47, 1
      %s49 = scalar_select %p46, %s47, %s48
      %p52 = pneg %p46
      %p53 = scmp.eq.s32.totalorder %s16, 1
      %p54 = por %p52, %p53
      %p55 = scmp.ne.s32.totalorder %s47, %s50
      %p56 = scmp.eq.s32.totalorder %s16, 0
      %p57 = por %p55, %p56
      %p58 = scmp.ne.s32.totalorder %s47, %s50
      %p59 = scmp.eq.s32.totalorder %s21, 1
      %p60 = por %p58, %p59
      %p61 = scmp.ne.s32.totalorder %s50, %s51
      %p62 = scmp.eq.s32.totalorder %s21, 0
      %p63 = por %p61, %p62
      %p64 = scmp.ne.s32.totalorder %s50, %s51
      %p65 = scmp.eq.s32.totalorder %s22, 1
      %p66 = por %p64, %p65
      %p68 = scmp.ne.s32.totalorder %s51, %s67
      %p69 = scmp.eq.s32.totalorder %s22, 0
      %p70 = por %p68, %p69
      %s71 = ssub.s32 %s16, %s23
      %p72 = scmp.eq.s32.totalorder %s71, 0
      %s74 = sadd.s32 %s73, 1
      %s75 = scalar_select %p72, %s73, %s74
      %p78 = pneg %p72
      %p79 = scmp.eq.s32.totalorder %s16, 1
      %p80 = por %p78, %p79
      %p81 = scmp.ne.s32.totalorder %s73, %s76
      %p82 = scmp.eq.s32.totalorder %s16, 0
      %p83 = por %p81, %p82
      %p84 = scmp.ne.s32.totalorder %s73, %s76
      %p85 = scmp.eq.s32.totalorder %s21, 1
      %p86 = por %p84, %p85
      %p87 = scmp.ne.s32.totalorder %s76, %s77
      %p88 = scmp.eq.s32.totalorder %s21, 0
      %p89 = por %p87, %p88
      %p90 = scmp.ne.s32.totalorder %s76, %s77
      %p91 = scmp.eq.s32.totalorder %s22, 1
      %p92 = por %p90, %p91
      %p94 = scmp.ne.s32.totalorder %s77, %s93
      %p95 = scmp.eq.s32.totalorder %s22, 0
      %p96 = por %p94, %p95
      %s97 = ssub.s32 %s16, %s23
      %p98 = scmp.eq.s32.totalorder %s97, 0
      %s100 = sadd.s32 %s99, 1
      %s101 = scalar_select %p98, %s99, %s100
      %p104 = pneg %p98
      %p105 = scmp.eq.s32.totalorder %s16, 1
      %p106 = por %p104, %p105
      %p107 = scmp.ne.s32.totalorder %s99, %s102
      %p108 = scmp.eq.s32.totalorder %s16, 0
      %p109 = por %p107, %p108
      %p110 = scmp.ne.s32.totalorder %s99, %s102
      %p111 = scmp.eq.s32.totalorder %s21, 1
      %p112 = por %p110, %p111
      %p113 = scmp.ne.s32.totalorder %s102, %s103
      %p114 = scmp.eq.s32.totalorder %s21, 0
      %p115 = por %p113, %p114
      %p116 = scmp.ne.s32.totalorder %s102, %s103
      %p117 = scmp.eq.s32.totalorder %s22, 1
      %p118 = por %p116, %p117
      %p120 = scmp.ne.s32.totalorder %s103, %s119
      %p121 = scmp.eq.s32.totalorder %s22, 0
      %p122 = por %p120, %p121
      %s124 = sadd.s32 %s123, 1
      %p127 = scmp.eq.s32.totalorder %s16, 1
      %p128 = scmp.ne.s32.totalorder %s123, %s125
      %p129 = scmp.eq.s32.totalorder %s16, 0
      %p130 = por %p128, %p129
      %p131 = scmp.ne.s32.totalorder %s123, %s125
      %p132 = scmp.eq.s32.totalorder %s21, 1
      %p133 = por %p131, %p132
      %p134 = scmp.ne.s32.totalorder %s125, %s126
      %p135 = scmp.eq.s32.totalorder %s21, 0
      %p136 = por %p134, %p135
      %p137 = scmp.ne.s32.totalorder %s125, %s126
      %p138 = scmp.eq.s32.totalorder %s22, 1
      %p139 = por %p137, %p138
      %p141 = scmp.ne.s32.totalorder %s126, %s140
      %p142 = scmp.eq.s32.totalorder %s22, 0
      %p143 = por %p141, %p142
      %s145 = sadd.s32 %s144, 1
      %p148 = scmp.eq.s32.totalorder %s16, 1
      %p149 = scmp.ne.s32.totalorder %s144, %s146
      %p150 = scmp.eq.s32.totalorder %s16, 0
      %p151 = por %p149, %p150
      %p152 = scmp.ne.s32.totalorder %s144, %s146
      %p153 = scmp.eq.s32.totalorder %s21, 1
      %p154 = por %p152, %p153
      %p155 = scmp.ne.s32.totalorder %s146, %s147
      %p156 = scmp.eq.s32.totalorder %s21, 0
      %p157 = por %p155, %p156
      %p158 = scmp.ne.s32.totalorder %s146, %s147
      %p159 = scmp.eq.s32.totalorder %s22, 1
      %p160 = por %p158, %p159
      %p162 = scmp.ne.s32.totalorder %s147, %s161
      %p163 = scmp.eq.s32.totalorder %s22, 0
      %p164 = por %p162, %p163
      %p165 = scmp.le.s32.totalorder 1, %s16
      %p166 = scmp.lt.s32.totalorder %s16, 3
      %p167 = pnand %p165, %p166
      %p168 = pneg %p167
      // Predicated region
      $region9: #{tpu_custom_call.1} parent=5 // pred_check
        _
      $region10: #{tpu_custom_call.1} parent=5 // pred_check_branch
        %170 = sbr.rel (%p167) target = $region12
      $region11: #{tpu_custom_call.1} parent=5 // pred_region
        %s171 = ssub.s32 %s16, 1
        // Predicated region
        $region13: #{tpu_custom_call.1} parent=11 // pred_check
          %p172 = pneg %p37
        $region14: #{tpu_custom_call.1} parent=11 // pred_check_branch
          %174 = sbr.rel (%p172) target = $region16
        $region15: #{tpu_custom_call.1} parent=11 // pred_region
          %s176 = ssub.s32 128, 128
          %177 = vsyncadd [#allocation4], %s176
          %s179 = sshll.u32 [#allocation3], 4
          %s180 = int_to_ptr.vmem [resolvable:$true] %s179
          %182 = dma.hbm_to_vmem [thread:$0]  %s0, 128, %s180, [#allocation4]
        $region16: #{tpu_custom_call.1} parent=11 // pred_fallthru
          _
        // Predicated region
        $region17: #{tpu_custom_call.1} parent=11 // pred_check
          %p183 = pneg %p136
        $region18: #{tpu_custom_call.1} parent=11 // pred_check_branch
          %185 = sbr.rel (%p183) target = $region20
        $region19: #{tpu_custom_call.1} parent=11 // pred_region
          _
        $region20: #{tpu_custom_call.1} parent=11 // pred_fallthru
          _
      $region12: #{tpu_custom_call.1} parent=5 // pred_fallthru
        _
      %p186 = scmp.lt.s32.totalorder %s16, 2
      // Predicated region
      $region21: #{tpu_custom_call.1} parent=5 // pred_check
        %p187 = pneg %p186
      $region22: #{tpu_custom_call.1} parent=5 // pred_check_branch
        %189 = sbr.rel (%p187) target = $region24
      $region23: #{tpu_custom_call.1} parent=5 // pred_region
        // Predicated region
        $region25: #{tpu_custom_call.1} parent=23 // pred_check
          %p190 = pneg %p57
        $region26: #{tpu_custom_call.1} parent=23 // pred_check_branch
          %192 = sbr.rel (%p190) target = $region28
        $region27: #{tpu_custom_call.1} parent=23 // pred_region
          %s193 = sand.u32 %s16, 1
          %s194 = scalar_lea.sflag [#allocation7], %s193
          %s195 = sand.u32 %s47, 1
          %s196 = smul.addr %s195, 128
          %s197 = scalar_lea.vmem [#allocation6], %s196
          %s199 = ssub.s32 2048, 2048
          %200 = vsyncadd %s194, %s199
          %s201 = smul.addr %s16, 64
          %s202 = scalar_lea.hbm %s1, %s201
          %s203 = sshll.u32 %s197, 4
          %s204 = int_to_ptr.vmem [resolvable:$true] %s203
          %209 = dma.hbm_to_vmem [thread:$0]  %s202, 2048, %s204, %s194, 128, 64, 4
        $region28: #{tpu_custom_call.1} parent=23 // pred_fallthru
          _
        // Predicated region
        $region29: #{tpu_custom_call.1} parent=23 // pred_check
          %p210 = pneg %p83
        $region30: #{tpu_custom_call.1} parent=23 // pred_check_branch
          %212 = sbr.rel (%p210) target = $region32
        $region31: #{tpu_custom_call.1} parent=23 // pred_region
          %p213 = scmp.lt.s32.totalorder %s16, 1
          %s214 = scalar_select %p213, %s16, 1
          %s215 = scalar_lea.vmem %s2, %s214
        $region32: #{tpu_custom_call.1} parent=23 // pred_fallthru
          _
        // Predicated region
        $region33: #{tpu_custom_call.1} parent=23 // pred_check
          %p216 = pneg %p109
        $region34: #{tpu_custom_call.1} parent=23 // pred_check_branch
          %218 = sbr.rel (%p216) target = $region36
        $region35: #{tpu_custom_call.1} parent=23 // pred_region
          %s219 = sand.u32 %s16, 1
          %s220 = scalar_lea.sflag [#allocation7], %s219
          %s221 = sand.u32 %s99, 1
          %s222 = smul.addr %s221, 64
          %s223 = scalar_lea.vmem [#allocation8], %s222
          %s224 = smul.u32 16, %s16
          %s226 = ssub.s32 1024, 1024
          %227 = vsyncadd %s220, %s226
          %s228 = smul.addr %s224, 64
          %s229 = scalar_lea.hbm %s3, %s228
          %s230 = sshll.u32 %s223, 4
          %s231 = int_to_ptr.vmem [resolvable:$true] %s230
          %236 = dma.hbm_to_vmem [thread:$0]  %s229, 1024, %s231, %s220, 64, 64, 4
        $region36: #{tpu_custom_call.1} parent=23 // pred_fallthru
          _
      $region24: #{tpu_custom_call.1} parent=5 // pred_fallthru
        _
      %p237 = scmp.le.s32.totalorder 1, %s16
      %p238 = scmp.lt.s32.totalorder %s16, 3
      %p239 = pnand %p237, %p238
      %p240 = pneg %p239
      // Predicated region
      $region37: #{tpu_custom_call.1} parent=5 // pred_check
        _
      $region38: #{tpu_custom_call.1} parent=5 // pred_check_branch
        %242 = sbr.rel (%p239) target = $region40
      $region39: #{tpu_custom_call.1} parent=5 // pred_region
        %s243 = ssub.s32 %s16, 1
        // Predicated region
        $region41: #{tpu_custom_call.1} parent=39 // pred_check
          %p244 = pneg %p37
        $region42: #{tpu_custom_call.1} parent=39 // pred_check_branch
          %246 = sbr.rel (%p244) target = $region44
        $region43: #{tpu_custom_call.1} parent=39 // pred_region
          %247 = dma.done [#allocation4], 128
        $region44: #{tpu_custom_call.1} parent=39 // pred_fallthru
          _
        %s248 = sand.u32 %s21, 1
        %s249 = scalar_lea.sflag [#allocation7], %s248
        %s250 = sand.u32 %s50, 1
        %s251 = smul.addr %s250, 128
        %s252 = scalar_lea.vmem [#allocation6], %s251
        // Predicated region
        $region45: #{tpu_custom_call.1} parent=39 // pred_check
          %p253 = pneg %p63
        $region46: #{tpu_custom_call.1} parent=39 // pred_check_branch
          %255 = sbr.rel (%p253) target = $region48
        $region47: #{tpu_custom_call.1} parent=39 // pred_region
          %256 = dma.done %s249, 2048
        $region48: #{tpu_custom_call.1} parent=39 // pred_fallthru
          _
        %s257 = sand.u32 %s21, 1
        %s258 = scalar_lea.sflag [#allocation7], %s257
        %s259 = sand.u32 %s102, 1
        %s260 = smul.addr %s259, 64
        %s261 = scalar_lea.vmem [#allocation8], %s260
        // Predicated region
        $region49: #{tpu_custom_call.1} parent=39 // pred_check
          %p262 = pneg %p115
        $region50: #{tpu_custom_call.1} parent=39 // pred_check_branch
          %264 = sbr.rel (%p262) target = $region52
        $region51: #{tpu_custom_call.1} parent=39 // pred_region
          %265 = dma.done %s258, 1024
        $region52: #{tpu_custom_call.1} parent=39 // pred_fallthru
          _
        %p266 = pneg %p37
        %p267 = pneg %p34
        %s268 = sand.u32 %s21, 1
        %s269 = scalar_lea.sflag [#allocation7], %s268
        %s270 = sand.u32 %s50, 1
        %s271 = smul.addr %s270, 128
        %s272 = scalar_lea.vmem [#allocation6], %s271
        %p273 = pneg %p63
        %p274 = pneg %p60
        %p275 = scmp.lt.s32.totalorder %s21, 1
        %s276 = scalar_select %p275, %s21, 1
        %s277 = scalar_lea.vmem %s2, %s276
        %p278 = pneg %p89
        %p279 = pneg %p86
        %s280 = sand.u32 %s21, 1
        %s281 = scalar_lea.sflag [#allocation7], %s280
        %s282 = sand.u32 %s102, 1
        %s283 = smul.addr %s282, 64
        %s284 = scalar_lea.vmem [#allocation8], %s283
        %p285 = pneg %p115
        %p286 = pneg %p112
        %p287 = pneg %p136
        %p288 = pneg %p133
        %p289 = pneg %p157
        %p290 = pneg %p154
        %p291 = scmp.lt.s32.totalorder %s21, 1
        %s292 = scalar_select %p291, %s21, 1
        %s293 = scalar_lea.vmem %s2, %s292
        %s294 = smul.u32 16, %s21
        %p296 = scmp.eq.s32.totalorder %s21, 0
        // Predicated region
        $region53: #{tpu_custom_call.1} parent=39 // pred_check
          %p297 = pneg %p296
        $region54: #{tpu_custom_call.1} parent=39 // pred_check_branch
          %299 = sbr.rel (%p297) target = $region56
        $region55: #{tpu_custom_call.1} parent=39 // pred_region
          %300 = vst [vmem:[#allocation2] sm:$0xff] 0.0
        $region56: #{tpu_custom_call.1} parent=39 // pred_fallthru
          _
        %v301 = vld [vmem:[#allocation3] sm:$0xff]
        %v302 = vld [vmem:[%s252] sm:$0xf]
        %v303 = vld [vmem:[%s252 + $0x4] sm:$0xf]
        %v304 = vld [vmem:[%s252 + $0x8] sm:$0xf]
        %v305 = vld [vmem:[%s252 + $0xc] sm:$0xf]
        %v306 = vld [vmem:[%s252 + $0x10] sm:$0xf]
        %v307 = vld [vmem:[%s252 + $0x14] sm:$0xf]
        %v308 = vld [vmem:[%s252 + $0x18] sm:$0xf]
        %v309 = vld [vmem:[%s252 + $0x1c] sm:$0xf]
        %v310 = vld [vmem:[%s252 + $0x20] sm:$0xf]
        %v311 = vld [vmem:[%s252 + $0x24] sm:$0xf]
        %v312 = vld [vmem:[%s252 + $0x28] sm:$0xf]
        %v313 = vld [vmem:[%s252 + $0x2c] sm:$0xf]
        %v314 = vld [vmem:[%s252 + $0x30] sm:$0xf]
        %v315 = vld [vmem:[%s252 + $0x34] sm:$0xf]
        %v316 = vld [vmem:[%s252 + $0x38] sm:$0xf]
        %v317 = vld [vmem:[%s252 + $0x3c] sm:$0xf]
        %v318 = vld [vmem:[%s252 + $0x40] sm:$0xf]
        %v319 = vld [vmem:[%s252 + $0x44] sm:$0xf]
        %v320 = vld [vmem:[%s252 + $0x48] sm:$0xf]
        %v321 = vld [vmem:[%s252 + $0x4c] sm:$0xf]
        %v322 = vld [vmem:[%s252 + $0x50] sm:$0xf]
        %v323 = vld [vmem:[%s252 + $0x54] sm:$0xf]
        %v324 = vld [vmem:[%s252 + $0x58] sm:$0xf]
        %v325 = vld [vmem:[%s252 + $0x5c] sm:$0xf]
        %v326 = vld [vmem:[%s252 + $0x60] sm:$0xf]
        %v327 = vld [vmem:[%s252 + $0x64] sm:$0xf]
        %v328 = vld [vmem:[%s252 + $0x68] sm:$0xf]
        %v329 = vld [vmem:[%s252 + $0x6c] sm:$0xf]
        %v330 = vld [vmem:[%s252 + $0x70] sm:$0xf]
        %v331 = vld [vmem:[%s252 + $0x74] sm:$0xf]
        %v332 = vld [vmem:[%s252 + $0x78] sm:$0xf]
        %v333 = vld [vmem:[%s252 + $0x7c] sm:$0xf]
        %v334 = vld [vmem:[%s293] sm:$0x1]
        %v336 = vlaneseq
        %v337 = vshrl.u32 %v336, 7
        %v338 = vsub.s32 0, %v337
        %v339 = vrot.slane %v334, %v338
        %v342 = vunpack.c.l.b16 %v301
        %v343 = vunpack.c.h.b16 %v301
        %v344 = vpack.c.b16 %v342, %v342
        %v345 = vpack.c.b16 %v343, %v343
        %v380 = vunpack.c.l.b16 %v302
        %v381 = vunpack.c.l.b16 %v303
        %v382 = vunpack.c.l.b16 %v304
        %v383 = vunpack.c.l.b16 %v305
        %v384 = vunpack.c.l.b16 %v306
        %v385 = vunpack.c.l.b16 %v307
        %v386 = vunpack.c.l.b16 %v308
        %v387 = vunpack.c.l.b16 %v309
        %v388 = vunpack.c.l.b16 %v310
        %v389 = vunpack.c.l.b16 %v311
        %v390 = vunpack.c.l.b16 %v312
        %v391 = vunpack.c.l.b16 %v313
        %v392 = vunpack.c.l.b16 %v314
        %v393 = vunpack.c.l.b16 %v315
        %v394 = vunpack.c.l.b16 %v316
        %v395 = vunpack.c.l.b16 %v317
        %v396 = vunpack.c.l.b16 %v318
        %v397 = vunpack.c.l.b16 %v319
        %v398 = vunpack.c.l.b16 %v320
        %v399 = vunpack.c.l.b16 %v321
        %v400 = vunpack.c.l.b16 %v322
        %v401 = vunpack.c.l.b16 %v323
        %v402 = vunpack.c.l.b16 %v324
        %v403 = vunpack.c.l.b16 %v325
        %v404 = vunpack.c.l.b16 %v326
        %v405 = vunpack.c.l.b16 %v327
        %v406 = vunpack.c.l.b16 %v328
        %v407 = vunpack.c.l.b16 %v329
        %v408 = vunpack.c.l.b16 %v330
        %v409 = vunpack.c.l.b16 %v331
        %v410 = vunpack.c.l.b16 %v332
        %v411 = vunpack.c.l.b16 %v333
        %v412 = vpack.c.b16 %v381, %v380
        %v413 = vpack.c.b16 %v383, %v382
        %v414 = vpack.c.b16 %v385, %v384
        %v415 = vpack.c.b16 %v387, %v386
        %v416 = vpack.c.b16 %v389, %v388
        %v417 = vpack.c.b16 %v391, %v390
        %v418 = vpack.c.b16 %v393, %v392
        %v419 = vpack.c.b16 %v395, %v394
        %v420 = vpack.c.b16 %v397, %v396
        %v421 = vpack.c.b16 %v399, %v398
        %v422 = vpack.c.b16 %v401, %v400
        %v423 = vpack.c.b16 %v403, %v402
        %v424 = vpack.c.b16 %v405, %v404
        %v425 = vpack.c.b16 %v407, %v406
        %v426 = vpack.c.b16 %v409, %v408
        %v427 = vpack.c.b16 %v411, %v410
        %444 = vmatprep.subr.bf16.mxu0 0
        %445 = vmatpush1.bf16.msra.mxu0 %v419
        %446 = vmatprep.subr.bf16.mxu0 0
        %447 = vmatpush1.bf16.msra.mxu0 %v418
        %448 = vmatprep.subr.bf16.mxu0 0
        %449 = vmatpush1.bf16.msra.mxu0 %v417
        %450 = vmatprep.subr.bf16.mxu0 0
        %451 = vmatpush1.bf16.msra.mxu0 %v416
        %452 = vmatprep.subr.bf16.mxu0 0
        %453 = vmatpush1.bf16.msra.mxu0 %v415
        %454 = vmatprep.subr.bf16.mxu0 0
        %455 = vmatpush1.bf16.msra.mxu0 %v414
        %456 = vmatprep.subr.bf16.mxu0 0
        %457 = vmatpush1.bf16.msra.mxu0 %v413
        %458 = vmatprep.subr.bf16.mxu0 0
        %459 = vmatpush1.bf16.msra.mxu0 %v412
        %460 = vmatprep.subr.bf16.mxu0 0
        %461 = vmatpush2.bf16.msra.mxu0 %v427
        %462 = vmatprep.subr.bf16.mxu0 0
        %463 = vmatpush2.bf16.msra.mxu0 %v426
        %464 = vmatprep.subr.bf16.mxu0 0
        %465 = vmatpush2.bf16.msra.mxu0 %v425
        %466 = vmatprep.subr.bf16.mxu0 0
        %467 = vmatpush2.bf16.msra.mxu0 %v424
        %468 = vmatprep.subr.bf16.mxu0 0
        %469 = vmatpush2.bf16.msra.mxu0 %v423
        %470 = vmatprep.subr.bf16.mxu0 0
        %471 = vmatpush2.bf16.msra.mxu0 %v422
        %472 = vmatprep.subr.bf16.mxu0 0
        %473 = vmatpush2.bf16.msra.mxu0 %v421
        %474 = vmatprep.subr.bf16.mxu0 0
        %475 = vmatpush2.bf16.msra.mxu0 %v420
        %476 = vmatprep.mubr.bf16.mxu0 %v345
        %477 = vmatmul.mubr.bf16.gmra.mxu0 %v344
        %v478 = vpop.f32.mrf.mxu0
        %v479 = vadd.f32 %v339, %v478
        %v480 = vpop.f32.mrf.mxu0
        %v481 = vpop.f32.mrf.mxu0
        %v482 = vpop.f32.mrf.mxu0
        %483 = vdwg.mxu0
        %v484 = vtanh.pop %v479
        %v485 = vld [vmem:[#allocation2] sm:$0xff]
        %v486 = vpack.c.bf16 %v484, %v484
        %v487 = vld [vmem:[%s261] sm:$0xf]
        %v488 = vld [vmem:[%s261 + $0x4] sm:$0xf]
        %v489 = vld [vmem:[%s261 + $0x8] sm:$0xf]
        %v490 = vld [vmem:[%s261 + $0xc] sm:$0xf]
        %v491 = vld [vmem:[%s261 + $0x10] sm:$0xf]
        %v492 = vld [vmem:[%s261 + $0x14] sm:$0xf]
        %v493 = vld [vmem:[%s261 + $0x18] sm:$0xf]
        %v494 = vld [vmem:[%s261 + $0x1c] sm:$0xf]
        %v495 = vld [vmem:[%s261 + $0x20] sm:$0xf]
        %v496 = vld [vmem:[%s261 + $0x24] sm:$0xf]
        %v497 = vld [vmem:[%s261 + $0x28] sm:$0xf]
        %v498 = vld [vmem:[%s261 + $0x2c] sm:$0xf]
        %v499 = vld [vmem:[%s261 + $0x30] sm:$0xf]
        %v500 = vld [vmem:[%s261 + $0x34] sm:$0xf]
        %v501 = vld [vmem:[%s261 + $0x38] sm:$0xf]
        %v502 = vld [vmem:[%s261 + $0x3c] sm:$0xf]
        %v519 = vunpack.c.l.b16 %v487
        %v520 = vunpack.c.l.b16 %v488
        %v521 = vunpack.c.l.b16 %v489
        %v522 = vunpack.c.l.b16 %v490
        %v523 = vunpack.c.l.b16 %v491
        %v524 = vunpack.c.l.b16 %v492
        %v525 = vunpack.c.l.b16 %v493
        %v526 = vunpack.c.l.b16 %v494
        %v527 = vunpack.c.l.b16 %v495
        %v528 = vunpack.c.l.b16 %v496
        %v529 = vunpack.c.l.b16 %v497
        %v530 = vunpack.c.l.b16 %v498
        %v531 = vunpack.c.l.b16 %v499
        %v532 = vunpack.c.l.b16 %v500
        %v533 = vunpack.c.l.b16 %v501
        %v534 = vunpack.c.l.b16 %v502
        %v535 = vpack.c.b16 %v520, %v519
        %v536 = vpack.c.b16 %v522, %v521
        %v537 = vpack.c.b16 %v524, %v523
        %v538 = vpack.c.b16 %v526, %v525
        %v539 = vpack.c.b16 %v528, %v527
        %v540 = vpack.c.b16 %v530, %v529
        %v541 = vpack.c.b16 %v532, %v531
        %v542 = vpack.c.b16 %v534, %v533
        %551 = vmatprep.subr.bf16.mxu0 0
        %552 = vmatpush1.bf16.msra.mxu0 %v542
        %553 = vmatprep.subr.bf16.mxu0 0
        %554 = vmatpush1.bf16.msra.mxu0 %v541
        %555 = vmatprep.subr.bf16.mxu0 0
        %556 = vmatpush1.bf16.msra.mxu0 %v540
        %557 = vmatprep.subr.bf16.mxu0 0
        %558 = vmatpush1.bf16.msra.mxu0 %v539
        %559 = vmatprep.subr.bf16.mxu0 0
        %560 = vmatpush1.bf16.msra.mxu0 %v538
        %561 = vmatprep.subr.bf16.mxu0 0
        %562 = vmatpush1.bf16.msra.mxu0 %v537
        %563 = vmatprep.subr.bf16.mxu0 0
        %564 = vmatpush1.bf16.msra.mxu0 %v536
        %565 = vmatprep.subr.bf16.mxu0 0
        %566 = vmatpush1.bf16.msra.mxu0 %v535
        %567 = vmatprep.subr.bf16.mxu0 0
        %568 = vmatpush2.bf16.msra.mxu0 0
        %569 = vmatprep.subr.bf16.mxu0 0
        %570 = vmatpush2.bf16.msra.mxu0 0
        %571 = vmatprep.subr.bf16.mxu0 0
        %572 = vmatpush2.bf16.msra.mxu0 0
        %573 = vmatprep.subr.bf16.mxu0 0
        %574 = vmatpush2.bf16.msra.mxu0 0
        %575 = vmatprep.subr.bf16.mxu0 0
        %576 = vmatpush2.bf16.msra.mxu0 0
        %577 = vmatprep.subr.bf16.mxu0 0
        %578 = vmatpush2.bf16.msra.mxu0 0
        %579 = vmatprep.subr.bf16.mxu0 0
        %580 = vmatpush2.bf16.msra.mxu0 0
        %581 = vmatprep.subr.bf16.mxu0 0
        %582 = vmatpush2.bf16.msra.mxu0 0
        %583 = vmatprep.mubr.bf16.mxu0 0
        %584 = vmatmul.mubr.bf16.gmra.mxu0 %v486
        %v585 = vpop.f32.mrf.mxu0
        %v586 = vadd.f32 0.0, %v585
        %v587 = vpop.f32.mrf.mxu0
        %v588 = vpop.f32.mrf.mxu0
        %v589 = vpop.f32.mrf.mxu0
        %590 = vdwg.mxu0
        %v591 = vadd.f32 %v485, %v586
        %592 = vst [vmem:[#allocation2] sm:$0xff] %v591
        %p593 = scmp.eq.s32.totalorder %s21, 1
        // Predicated region
        $region57: #{tpu_custom_call.1} parent=39 // pred_check
          %p594 = pneg %p593
        $region58: #{tpu_custom_call.1} parent=39 // pred_check_branch
          %596 = sbr.rel (%p594) target = $region60
        $region59: #{tpu_custom_call.1} parent=39 // pred_region
          %v597 = vld [vmem:[#allocation2] sm:$0xff]
          %v598 = vld [vmem:[%s4] sm:$0x1]
          %v600 = vlaneseq
          %v601 = vshrl.u32 %v600, 7
          %v602 = vsub.s32 0, %v601
          %v603 = vrot.slane %v598, %v602
          %v605 = vadd.f32 %v597, %v603
          %606 = vst [vmem:[#allocation9] sm:$0xff] %v605
        $region60: #{tpu_custom_call.1} parent=39 // pred_fallthru
          _
        // Predicated region
        $region61: #{tpu_custom_call.1} parent=39 // pred_check
          %p607 = pneg %p154
        $region62: #{tpu_custom_call.1} parent=39 // pred_check_branch
          %609 = sbr.rel (%p607) target = $region64
        $region63: #{tpu_custom_call.1} parent=39 // pred_region
          %s611 = ssub.s32 128, 128
          %612 = vsyncadd [#allocation5], %s611
          %s614 = sshll.u32 [#allocation9], 4
          %s615 = int_to_ptr.vmem [resolvable:$true] %s614
          %617 = dma.vmem_to_hbm [thread:$0]  %s615, 128, %s5, [#allocation5]
        $region64: #{tpu_custom_call.1} parent=39 // pred_fallthru
          _
        // Predicated region
        $region65: #{tpu_custom_call.1} parent=39 // pred_check
          %p618 = pneg %p154
        $region66: #{tpu_custom_call.1} parent=39 // pred_check_branch
          %620 = sbr.rel (%p618) target = $region68
        $region67: #{tpu_custom_call.1} parent=39 // pred_region
          %621 = dma.done [#allocation5], 128
        $region68: #{tpu_custom_call.1} parent=39 // pred_fallthru
          _
      $region40: #{tpu_custom_call.1} parent=5 // pred_fallthru
        _
      %p622 = scmp.le.s32.totalorder 2, %s16
      // Predicated region
      $region69: #{tpu_custom_call.1} parent=5 // pred_check
        %p623 = pneg %p622
      $region70: #{tpu_custom_call.1} parent=5 // pred_check_branch
        %625 = sbr.rel (%p623) target = $region72
      $region71: #{tpu_custom_call.1} parent=5 // pred_region
        %s626 = ssub.s32 %s16, 2
      $region72: #{tpu_custom_call.1} parent=5 // pred_fallthru
        _
    $region6: #{tpu_custom_call.1} parent=1 // loop_footer
      %s20 = sadd.s32 1, %s16
    $region7: #{tpu_custom_call.1} parent=1 // loop_footer_branch
      %15 = sbr.rel target = $region3
    $region8: #{tpu_custom_call.1} parent=1 // loop_exit
      _
    %627 = vsyncpa [#allocation4], 1
    %s628 = scalar_lea.sflag [#allocation4], 1
    %629 = vsyncpa %s628, 1
    %630 = vsyncpa [#allocation7], 1
    %s631 = scalar_lea.sflag [#allocation7], 1
    %632 = vsyncpa %s631, 1
    %633 = vsyncpa [#allocation5], 1
    %s634 = scalar_lea.sflag [#allocation5], 1
    %635 = vsyncpa %s634, 1

</llo_original>
